<compile_context>
chip_gen: v7x
topology: tpu7x:2x2x1
jax: 0.10.0
libtpu: 0.0.40
codegen_flags: <defaults>
</compile_context>

<pallas_src>
import functools

import jax
import jax.numpy as jnp
from jax.experimental import pallas as pl
from jax.experimental.pallas import tpu as pltpu


def _im2col_3x3(x2d, H, W, not_left, not_right):
    """x2d: (C, H*W) channel-major flattened image (f32).

    Returns (9*C, H*W): rows [tap*C:(tap+1)*C] hold x[c, h+ky-1, w+kx-1]
    with zeros outside the image, tap = ky*3 + kx.
    """
    C, HW = x2d.shape
    zpad = jnp.zeros((C, W + 1), x2d.dtype)
    # (C, HW + 2W + 2): W+1 zero lanes on each side of the flattened image.
    xpad = jnp.concatenate([zpad, x2d, zpad], axis=1)
    taps = []
    for dy in (-1, 0, 1):
        for dx in (-1, 0, 1):
            s0 = (dy + 1) * W + dx + 1          # static lane offset
            p = xpad[:, s0:s0 + HW]             # (C, HW) shifted window
            if dx == -1:
                p = p * not_left                # kill wrap at w == 0
            elif dx == 1:
                p = p * not_right               # kill wrap at w == W-1
            taps.append(p)
    return jnp.concatenate(taps, axis=0)        # (9*C, HW)


def _con_fused_kernel(x1_ref, x2_ref, w1_ref, b1_ref, w2_ref, b2_ref, o_ref,
                      *, H, W):
    """One batch element per grid step.

    x1_ref: (1, C1, H*W)   x2_ref: (1, C2, H*W)      (channel-major, lane-dense)
    w1_ref: (Cout, 9*(C1+C2))   w2_ref: (Cout, 9*Cout)   (tap-major, ch-minor)
    b1_ref, b2_ref: (Cout, 1)
    o_ref: (1, Cout, H*W)  -> relu(conv2(relu(conv1(cat(x1, x2)))))
    """
    HW = H * W
    # Horizontal-edge masks, hoisted once (shared by both convs / all taps).
    wpos = jax.lax.broadcasted_iota(jnp.int32, (1, HW), 1) % W
    not_left = jnp.where(wpos == 0, 0.0, 1.0).astype(jnp.float32)
    not_right = jnp.where(wpos == W - 1, 0.0, 1.0).astype(jnp.float32)

    # torch.cat([x1, x2], dim=1) as an in-VMEM sublane concat (no HBM pass).
    x = jnp.concatenate([x1_ref[0], x2_ref[0]], axis=0).astype(jnp.float32)

    # conv1 + bias + ReLU: single (Cout, 9*Cin) x (9*Cin, HW) MXU matmul.
    p1 = _im2col_3x3(x, H, W, not_left, not_right)
    y1 = jnp.dot(w1_ref[...], p1, preferred_element_type=jnp.float32)
    y1 = jnp.maximum(y1 + b1_ref[...], 0.0)                   # (Cout, HW) f32

    # conv2 + bias + ReLU on the VMEM-resident intermediate.
    p2 = _im2col_3x3(y1, H, W, not_left, not_right)
    y2 = jnp.dot(w2_ref[...], p2, preferred_element_type=jnp.float32)
    y2 = jnp.maximum(y2 + b2_ref[...], 0.0)                   # (Cout, HW) f32

    # Lane-dense store (last dim = HW), already NCHW layout.
    o_ref[0] = y2.astype(o_ref.dtype)


@jax.jit
def con_forward(params, inputs1_nchw, inputs2_nchw):
    """Matches con.forward: cat on channel dim, conv->relu->conv->relu (NCHW)."""
    N, C1, H, W = inputs1_nchw.shape
    C2 = inputs2_nchw.shape[1]
    Cin = C1 + C2
    Cout = params["w1"].shape[0]
    HW = H * W

    # Free (contiguous) reshapes — no transpose / concat / pad HBM passes.
    x1 = inputs1_nchw.reshape(N, C1, HW)
    x2 = inputs2_nchw.reshape(N, C2, HW)
    # OIHW -> (Cout, 9*Cin), rows ordered tap-major / channel-minor to match
    # the in-kernel im2col ordering.
    w1m = jnp.transpose(params["w1"], (0, 2, 3, 1)).reshape(Cout, 9 * Cin)
    w2m = jnp.transpose(params["w2"], (0, 2, 3, 1)).reshape(Cout, 9 * Cout)
    b1 = params["b1"].reshape(Cout, 1)
    b2 = params["b2"].reshape(Cout, 1)

    kernel = functools.partial(_con_fused_kernel, H=H, W=W)
    out = pl.pallas_call(
        kernel,
        out_shape=jax.ShapeDtypeStruct((N, Cout, HW), inputs1_nchw.dtype),
        grid=(N,),
        in_specs=[
            pl.BlockSpec((1, C1, HW), lambda n: (n, 0, 0)),
            pl.BlockSpec((1, C2, HW), lambda n: (n, 0, 0)),
            pl.BlockSpec((Cout, 9 * Cin), lambda n: (0, 0)),
            pl.BlockSpec((Cout, 1), lambda n: (0, 0)),
            pl.BlockSpec((Cout, 9 * Cout), lambda n: (0, 0)),
            pl.BlockSpec((Cout, 1), lambda n: (0, 0)),
        ],
        out_specs=pl.BlockSpec((1, Cout, HW), lambda n: (n, 0, 0)),
        compiler_params=pltpu.CompilerParams(
            dimension_semantics=("parallel",)),
    )(x1, x2, w1m, b1, w2m, b2)

    # Contiguous reshape back to NCHW — free.
    return out.reshape(N, Cout, H, W)


def init_con_params(key, in_size, out_size, dtype=jnp.float32):
    """Deterministic synthetic parameters, shapes matching nn.Conv2d (OIHW)."""
    k1, k2, k3, k4 = jax.random.split(key, 4)
    s1 = 1.0 / jnp.sqrt(in_size * 9.0)
    s2 = 1.0 / jnp.sqrt(out_size * 9.0)
    w1 = jax.random.uniform(k1, (out_size, in_size, 3, 3), dtype, -s1, s1)
    b1 = jax.random.uniform(k2, (out_size,), dtype, -s1, s1)
    w2 = jax.random.uniform(k3, (out_size, out_size, 3, 3), dtype, -s2, s2)
    b2 = jax.random.uniform(k4, (out_size,), dtype, -s2, s2)
    return {"w1": w1, "b1": b1, "w2": w2, "b2": b2}


def _reference_forward(params, x1, x2):
    x = jnp.concatenate([x1, x2], axis=1)
    dn = ("NCHW", "OIHW", "NCHW")
    y = jax.lax.conv_general_dilated(x, params["w1"], (1, 1), "SAME",
                                     dimension_numbers=dn)
    y = jax.nn.relu(y + params["b1"][None, :, None, None])
    y = jax.lax.conv_general_dilated(y, params["w2"], (1, 1), "SAME",
                                     dimension_numbers=dn)
    y = jax.nn.relu(y + params["b2"][None, :, None, None])
    return y


if __name__ == "__main__":
    key = jax.random.PRNGKey(0)
    kx1, kx2, kp = jax.random.split(key, 3)

    # Small shapes: two 4-channel NCHW feature maps -> in_size = 8.
    N, C1, C2, H, W = 2, 4, 4, 16, 16
    in_size, out_size = C1 + C2, 8

    inputs1 = jax.random.normal(kx1, (N, C1, H, W), jnp.float32)
    inputs2 = jax.random.normal(kx2, (N, C2, H, W), jnp.float32)
    params = init_con_params(kp, in_size, out_size)

    out = con_forward(params, inputs1, inputs2)
    out = jax.block_until_ready(out)

    ref = _reference_forward(params, inputs1, inputs2)
    assert out.shape == (N, out_size, H, W)
    assert jnp.allclose(out, ref, atol=1e-4, rtol=1e-4)

    print("KERNEL_OK")
</pallas_src>

<mosaic_0001>
module attributes {stable_mosaic.version = 11 : i64} {
  func.func @_con_fused_kernel(%arg0: i32, %arg1: memref<1x4x256xf32, #tpu.memory_space<vmem>>, %arg2: memref<1x4x256xf32, #tpu.memory_space<vmem>>, %arg3: memref<8x72xf32, #tpu.memory_space<vmem>>, %arg4: memref<8x1xf32, #tpu.memory_space<vmem>>, %arg5: memref<8x72xf32, #tpu.memory_space<vmem>>, %arg6: memref<8x1xf32, #tpu.memory_space<vmem>>, %arg7: memref<1x8x256xf32, #tpu.memory_space<vmem>>) attributes {dimension_semantics = [#tpu.dimension_semantics<parallel>], iteration_bounds = array<i64: 2>, scalar_prefetch = 0 : i64, scratch_operands = 0 : i64, tpu.core_type = #tpu.core_type<tc>, window_params = [{transform_indices = @transform_0, window_bounds = array<i64: 1, 4, 256>}, {transform_indices = @transform_1, window_bounds = array<i64: 1, 4, 256>}, {pipeline_mode = #tpu.pipeline_mode<synchronous>, transform_indices = @transform_2, window_bounds = array<i64: 8, 72>}, {pipeline_mode = #tpu.pipeline_mode<synchronous>, transform_indices = @transform_3, window_bounds = array<i64: 8, 1>}, {pipeline_mode = #tpu.pipeline_mode<synchronous>, transform_indices = @transform_4, window_bounds = array<i64: 8, 72>}, {pipeline_mode = #tpu.pipeline_mode<synchronous>, transform_indices = @transform_5, window_bounds = array<i64: 8, 1>}, {transform_indices = @transform_6, window_bounds = array<i64: 1, 8, 256>}]} {
    %0 = tpu.iota {dimensions = array<i32: 1>} : vector<1x256xi32>
    %c16_i32 = arith.constant 16 : i32
    %c0_i32 = arith.constant 0 : i32
    %1 = arith.cmpi eq, %c16_i32, %c0_i32 : i32
    %c1_i32 = arith.constant 1 : i32
    %2 = arith.select %1, %c1_i32, %c16_i32 : i32
    %3 = vector.broadcast %2 : i32 to vector<1x256xi32>
    %4 = arith.remsi %0, %3 : vector<1x256xi32>
    %c0_i32_0 = arith.constant 0 : i32
    %5 = vector.broadcast %c0_i32_0 : i32 to vector<1x256xi32>
    %6 = arith.cmpi ne, %4, %5 : vector<1x256xi32>
    %c0_i32_1 = arith.constant 0 : i32
    %7 = vector.broadcast %c0_i32_1 : i32 to vector<1x256xi32>
    %8 = arith.cmpi slt, %4, %7 : vector<1x256xi32>
    %c0_i32_2 = arith.constant 0 : i32
    %9 = arith.cmpi slt, %2, %c0_i32_2 : i32
    %10 = vector.broadcast %9 : i1 to vector<1x256xi1>
    %11 = vector.broadcast %10 : vector<1x256xi1> to vector<1x256xi1>
    %12 = arith.xori %8, %11 : vector<1x256xi1>
    %13 = arith.andi %12, %6 : vector<1x256xi1>
    %14 = vector.broadcast %2 : i32 to vector<1x256xi32>
    %15 = arith.addi %4, %14 : vector<1x256xi32>
    %16 = arith.select %13, %15, %4 : vector<1x256xi1>, vector<1x256xi32>
    %c0_i32_3 = arith.constant 0 : i32
    %17 = vector.broadcast %c0_i32_3 : i32 to vector<1x256xi32>
    %18 = arith.cmpi eq, %16, %17 : vector<1x256xi32>
    %cst = arith.constant 0.000000e+00 : f32
    %cst_4 = arith.constant 1.000000e+00 : f32
    %19 = vector.broadcast %cst : f32 to vector<1x256xf32>
    %20 = vector.broadcast %cst_4 : f32 to vector<1x256xf32>
    %21 = arith.select %18, %19, %20 : vector<1x256xi1>, vector<1x256xf32>
    %c15_i32 = arith.constant 15 : i32
    %22 = vector.broadcast %c15_i32 : i32 to vector<1x256xi32>
    %23 = arith.cmpi eq, %16, %22 : vector<1x256xi32>
    %cst_5 = arith.constant 0.000000e+00 : f32
    %cst_6 = arith.constant 1.000000e+00 : f32
    %24 = vector.broadcast %cst_5 : f32 to vector<1x256xf32>
    %25 = vector.broadcast %cst_6 : f32 to vector<1x256xf32>
    %26 = arith.select %23, %24, %25 : vector<1x256xi1>, vector<1x256xf32>
    %c0 = arith.constant 0 : index
    %c0_7 = arith.constant 0 : index
    %c0_8 = arith.constant 0 : index
    %27 = vector.load %arg1[%c0, %c0_7, %c0_8] : memref<1x4x256xf32, #tpu.memory_space<vmem>>, vector<1x4x256xf32>
    %28 = vector.shape_cast %27 : vector<1x4x256xf32> to vector<4x256xf32>
    %c0_9 = arith.constant 0 : index
    %c0_10 = arith.constant 0 : index
    %c0_11 = arith.constant 0 : index
    %29 = vector.load %arg2[%c0_9, %c0_10, %c0_11] : memref<1x4x256xf32, #tpu.memory_space<vmem>>, vector<1x4x256xf32>
    %30 = vector.shape_cast %29 : vector<1x4x256xf32> to vector<4x256xf32>
    %31 = tpu.concatenate %28, %30 in 0 : vector<4x256xf32>, vector<4x256xf32> -> vector<8x256xf32>
    %cst_12 = arith.constant 0.000000e+00 : f32
    %32 = vector.broadcast %cst_12 : f32 to vector<8x17xf32>
    %33 = tpu.concatenate %32, %31, %32 in 1 : vector<8x17xf32>, vector<8x256xf32>, vector<8x17xf32> -> vector<8x290xf32>
    %34 = vector.extract_strided_slice %33 {offsets = [0, 0], sizes = [8, 256], strides = [1, 1]} : vector<8x290xf32> to vector<8x256xf32>
    %35 = vector.broadcast %21 : vector<1x256xf32> to vector<8x256xf32>
    %36 = arith.mulf %34, %35 : vector<8x256xf32>
    %37 = vector.extract_strided_slice %33 {offsets = [0, 1], sizes = [8, 256], strides = [1, 1]} : vector<8x290xf32> to vector<8x256xf32>
    %38 = vector.extract_strided_slice %33 {offsets = [0, 2], sizes = [8, 256], strides = [1, 1]} : vector<8x290xf32> to vector<8x256xf32>
    %39 = vector.broadcast %26 : vector<1x256xf32> to vector<8x256xf32>
    %40 = arith.mulf %38, %39 : vector<8x256xf32>
    %41 = vector.extract_strided_slice %33 {offsets = [0, 16], sizes = [8, 256], strides = [1, 1]} : vector<8x290xf32> to vector<8x256xf32>
    %42 = vector.broadcast %21 : vector<1x256xf32> to vector<8x256xf32>
    %43 = arith.mulf %41, %42 : vector<8x256xf32>
    %44 = vector.extract_strided_slice %33 {offsets = [0, 17], sizes = [8, 256], strides = [1, 1]} : vector<8x290xf32> to vector<8x256xf32>
    %45 = vector.extract_strided_slice %33 {offsets = [0, 18], sizes = [8, 256], strides = [1, 1]} : vector<8x290xf32> to vector<8x256xf32>
    %46 = vector.broadcast %26 : vector<1x256xf32> to vector<8x256xf32>
    %47 = arith.mulf %45, %46 : vector<8x256xf32>
    %48 = vector.extract_strided_slice %33 {offsets = [0, 32], sizes = [8, 256], strides = [1, 1]} : vector<8x290xf32> to vector<8x256xf32>
    %49 = vector.broadcast %21 : vector<1x256xf32> to vector<8x256xf32>
    %50 = arith.mulf %48, %49 : vector<8x256xf32>
    %51 = vector.extract_strided_slice %33 {offsets = [0, 33], sizes = [8, 256], strides = [1, 1]} : vector<8x290xf32> to vector<8x256xf32>
    %52 = vector.extract_strided_slice %33 {offsets = [0, 34], sizes = [8, 256], strides = [1, 1]} : vector<8x290xf32> to vector<8x256xf32>
    %53 = vector.broadcast %26 : vector<1x256xf32> to vector<8x256xf32>
    %54 = arith.mulf %52, %53 : vector<8x256xf32>
    %55 = tpu.concatenate %36, %37, %40, %43, %44, %47, %50, %51, %54 in 0 : vector<8x256xf32>, vector<8x256xf32>, vector<8x256xf32>, vector<8x256xf32>, vector<8x256xf32>, vector<8x256xf32>, vector<8x256xf32>, vector<8x256xf32>, vector<8x256xf32> -> vector<72x256xf32>
    %c0_13 = arith.constant 0 : index
    %c0_14 = arith.constant 0 : index
    %56 = vector.load %arg3[%c0_13, %c0_14] : memref<8x72xf32, #tpu.memory_space<vmem>>, vector<8x72xf32>
    %cst_15 = arith.constant dense<0.000000e+00> : vector<8x256xf32>
    %57 = tpu.matmul %56, %55, %cst_15 {dimension_numbers = #tpu.dot_dimension_numbers<[1], [0], [0], [1], [0, 0, 1, 1], [], []>} : vector<8x72xf32>, vector<72x256xf32>, vector<8x256xf32> -> vector<8x256xf32>
    %c0_16 = arith.constant 0 : index
    %c0_17 = arith.constant 0 : index
    %58 = vector.load %arg4[%c0_16, %c0_17] : memref<8x1xf32, #tpu.memory_space<vmem>>, vector<8x1xf32>
    %59 = vector.broadcast %58 : vector<8x1xf32> to vector<8x256xf32>
    %60 = arith.addf %57, %59 : vector<8x256xf32>
    %cst_18 = arith.constant 0.000000e+00 : f32
    %61 = vector.broadcast %cst_18 : f32 to vector<8x256xf32>
    %62 = arith.maximumf %60, %61 : vector<8x256xf32>
    %cst_19 = arith.constant 0.000000e+00 : f32
    %63 = vector.broadcast %cst_19 : f32 to vector<8x17xf32>
    %64 = tpu.concatenate %63, %62, %63 in 1 : vector<8x17xf32>, vector<8x256xf32>, vector<8x17xf32> -> vector<8x290xf32>
    %65 = vector.extract_strided_slice %64 {offsets = [0, 0], sizes = [8, 256], strides = [1, 1]} : vector<8x290xf32> to vector<8x256xf32>
    %66 = vector.broadcast %21 : vector<1x256xf32> to vector<8x256xf32>
    %67 = arith.mulf %65, %66 : vector<8x256xf32>
    %68 = vector.extract_strided_slice %64 {offsets = [0, 1], sizes = [8, 256], strides = [1, 1]} : vector<8x290xf32> to vector<8x256xf32>
    %69 = vector.extract_strided_slice %64 {offsets = [0, 2], sizes = [8, 256], strides = [1, 1]} : vector<8x290xf32> to vector<8x256xf32>
    %70 = vector.broadcast %26 : vector<1x256xf32> to vector<8x256xf32>
    %71 = arith.mulf %69, %70 : vector<8x256xf32>
    %72 = vector.extract_strided_slice %64 {offsets = [0, 16], sizes = [8, 256], strides = [1, 1]} : vector<8x290xf32> to vector<8x256xf32>
    %73 = vector.broadcast %21 : vector<1x256xf32> to vector<8x256xf32>
    %74 = arith.mulf %72, %73 : vector<8x256xf32>
    %75 = vector.extract_strided_slice %64 {offsets = [0, 17], sizes = [8, 256], strides = [1, 1]} : vector<8x290xf32> to vector<8x256xf32>
    %76 = vector.extract_strided_slice %64 {offsets = [0, 18], sizes = [8, 256], strides = [1, 1]} : vector<8x290xf32> to vector<8x256xf32>
    %77 = vector.broadcast %26 : vector<1x256xf32> to vector<8x256xf32>
    %78 = arith.mulf %76, %77 : vector<8x256xf32>
    %79 = vector.extract_strided_slice %64 {offsets = [0, 32], sizes = [8, 256], strides = [1, 1]} : vector<8x290xf32> to vector<8x256xf32>
    %80 = vector.broadcast %21 : vector<1x256xf32> to vector<8x256xf32>
    %81 = arith.mulf %79, %80 : vector<8x256xf32>
    %82 = vector.extract_strided_slice %64 {offsets = [0, 33], sizes = [8, 256], strides = [1, 1]} : vector<8x290xf32> to vector<8x256xf32>
    %83 = vector.extract_strided_slice %64 {offsets = [0, 34], sizes = [8, 256], strides = [1, 1]} : vector<8x290xf32> to vector<8x256xf32>
    %84 = vector.broadcast %26 : vector<1x256xf32> to vector<8x256xf32>
    %85 = arith.mulf %83, %84 : vector<8x256xf32>
    %86 = tpu.concatenate %67, %68, %71, %74, %75, %78, %81, %82, %85 in 0 : vector<8x256xf32>, vector<8x256xf32>, vector<8x256xf32>, vector<8x256xf32>, vector<8x256xf32>, vector<8x256xf32>, vector<8x256xf32>, vector<8x256xf32>, vector<8x256xf32> -> vector<72x256xf32>
    %c0_20 = arith.constant 0 : index
    %c0_21 = arith.constant 0 : index
    %87 = vector.load %arg5[%c0_20, %c0_21] : memref<8x72xf32, #tpu.memory_space<vmem>>, vector<8x72xf32>
    %cst_22 = arith.constant dense<0.000000e+00> : vector<8x256xf32>
    %88 = tpu.matmul %87, %86, %cst_22 {dimension_numbers = #tpu.dot_dimension_numbers<[1], [0], [0], [1], [0, 0, 1, 1], [], []>} : vector<8x72xf32>, vector<72x256xf32>, vector<8x256xf32> -> vector<8x256xf32>
    %c0_23 = arith.constant 0 : index
    %c0_24 = arith.constant 0 : index
    %89 = vector.load %arg6[%c0_23, %c0_24] : memref<8x1xf32, #tpu.memory_space<vmem>>, vector<8x1xf32>
    %90 = vector.broadcast %89 : vector<8x1xf32> to vector<8x256xf32>
    %91 = arith.addf %88, %90 : vector<8x256xf32>
    %cst_25 = arith.constant 0.000000e+00 : f32
    %92 = vector.broadcast %cst_25 : f32 to vector<8x256xf32>
    %93 = arith.maximumf %91, %92 : vector<8x256xf32>
    %c0_26 = arith.constant 0 : index
    %c0_27 = arith.constant 0 : index
    %c0_28 = arith.constant 0 : index
    %94 = vector.load %arg7[%c0_26, %c0_27, %c0_28] : memref<1x8x256xf32, #tpu.memory_space<vmem>>, vector<1x8x256xf32>
    %95 = vector.shape_cast %94 : vector<1x8x256xf32> to vector<8x256xf32>
    %96 = vector.shape_cast %93 : vector<8x256xf32> to vector<1x8x256xf32>
    tpu.vector_store %arg7[%c0_26, %c0_27, %c0_28], %96 {strides = array<i32>} : memref<1x8x256xf32, #tpu.memory_space<vmem>>, vector<1x8x256xf32>,
    return
  }
  func.func @transform_0(%arg0: i32) -> (i32, i32, i32) {
    %c0_i32 = arith.constant 0 : i32
    %c0_i32_0 = arith.constant 0 : i32
    %c0_i32_1 = arith.constant 0 : i32
    return %arg0, %c0_i32, %c0_i32_0 : i32, i32, i32
  }
  func.func @transform_1(%arg0: i32) -> (i32, i32, i32) {
    %c0_i32 = arith.constant 0 : i32
    %c0_i32_0 = arith.constant 0 : i32
    %c0_i32_1 = arith.constant 0 : i32
    return %arg0, %c0_i32, %c0_i32_0 : i32, i32, i32
  }
  func.func @transform_2(%arg0: i32) -> (i32, i32) {
    %c0_i32 = arith.constant 0 : i32
    %c0_i32_0 = arith.constant 0 : i32
    %c0_i32_1 = arith.constant 0 : i32
    return %c0_i32, %c0_i32_0 : i32, i32
  }
  func.func @transform_3(%arg0: i32) -> (i32, i32) {
    %c0_i32 = arith.constant 0 : i32
    %c0_i32_0 = arith.constant 0 : i32
    %c0_i32_1 = arith.constant 0 : i32
    return %c0_i32, %c0_i32_0 : i32, i32
  }
  func.func @transform_4(%arg0: i32) -> (i32, i32) {
    %c0_i32 = arith.constant 0 : i32
    %c0_i32_0 = arith.constant 0 : i32
    %c0_i32_1 = arith.constant 0 : i32
    return %c0_i32, %c0_i32_0 : i32, i32
  }
  func.func @transform_5(%arg0: i32) -> (i32, i32) {
    %c0_i32 = arith.constant 0 : i32
    %c0_i32_0 = arith.constant 0 : i32
    %c0_i32_1 = arith.constant 0 : i32
    return %c0_i32, %c0_i32_0 : i32, i32
  }
  func.func @transform_6(%arg0: i32) -> (i32, i32, i32) {
    %c0_i32 = arith.constant 0 : i32
    %c0_i32_0 = arith.constant 0 : i32
    %c0_i32_1 = arith.constant 0 : i32
    return %arg0, %c0_i32, %c0_i32_0 : i32, i32, i32
  }
}

</mosaic_0001>

<llo_original>
// kernel: con_forward.1
$region0: #{con_forward.1}
  #allocation0 [shape = 'u32[]', space=smem, size = 0x4, offset = 0x4, fixed_abs, tag = 'smem constant byte address 0x4 - core index']
  #allocation1 [shape = 'u32[144,128]{1,0:T(1,128)}', space=vmem, size = 0x12000, scoped, tag = 'internal scratch']
  %s0 = inlined_call_operand.vmem [shape: f32[2,4,256], index: 0, kind: input, shape index: {}]
  %s1 = inlined_call_operand.vmem [shape: f32[2,4,256], index: 1, kind: input, shape index: {}]
  %s2 = inlined_call_operand.vmem [shape: f32[8,72], index: 2, kind: input, shape index: {}]
  %s3 = inlined_call_operand.vmem [shape: f32[8,1], index: 3, kind: input, shape index: {}]
  %s4 = inlined_call_operand.vmem [shape: f32[8,72], index: 4, kind: input, shape index: {}]
  %s5 = inlined_call_operand.vmem [shape: f32[8,1], index: 5, kind: input, shape index: {}]
  %s6 = inlined_call_operand.vmem [shape: f32[2,8,256], index: 6, kind: output, shape index: {}]
  %s7 = sld [smem:[#allocation0]]
  $region57: #{con_forward.1} parent=0
    _
  %s9 = ssub.s32 1, %s7
  %s10 = scalar_select 0, %s9, %s7
  loop: start=0, step=1, limit=4
  $region2: #{con_forward.1} parent=0 // loop_pre_header
    _
  $region3: #{con_forward.1} parent=0 // loop_header
    %s12 = sphi 0, %s16
    %p13 = scmp.ge.s32.totalorder %s12, 4
    %s22 = sphi 0, %s24
    %s25 = sphi 0, %s22
    %s26 = sphi 0, %s25
    %s42 = sphi 0, %s26
    %s48 = sphi 0, %s50
    %s51 = sphi 0, %s48
    %s52 = sphi 0, %s51
    %s68 = sphi 0, %s52
    %s72 = sphi 0, %s72
    %s74 = sphi 0, %s72
    %s75 = sphi 0, %s74
    %s89 = sphi 0, %s75
    %s93 = sphi 0, %s93
    %s95 = sphi 0, %s93
    %s96 = sphi 0, %s95
    %s110 = sphi 0, %s96
    %s114 = sphi 0, %s114
    %s116 = sphi 0, %s114
    %s117 = sphi 0, %s116
    %s131 = sphi 0, %s117
    %s135 = sphi 0, %s135
    %s137 = sphi 0, %s135
    %s138 = sphi 0, %s137
    %s152 = sphi 0, %s138
    %s158 = sphi 0, %s160
    %s161 = sphi 0, %s158
    %s162 = sphi 0, %s161
    %s178 = sphi 0, %s162
  $region4: #{con_forward.1} parent=0 // loop_header_branch
    %15 = sbr.rel (%p13) target = $region8
  $region5: #{con_forward.1} parent=0 // loop_body
    %s17 = ssub.s32 %s12, 1
    %s18 = ssub.s32 %s12, 2
    %s19 = sadd.s32 %s12, 1
    %s20 = ssub.s32 %s12, %s19
    %p21 = scmp.eq.s32.totalorder %s20, 0
    %s23 = sadd.s32 %s22, 1
    %s24 = scalar_select %p21, %s22, %s23
    %p27 = pneg %p21
    %p28 = scmp.eq.s32.totalorder %s12, 1
    %p29 = por %p27, %p28
    %p30 = scmp.ne.s32.totalorder %s22, %s25
    %p31 = scmp.eq.s32.totalorder %s12, 0
    %p32 = por %p30, %p31
    %p33 = scmp.ne.s32.totalorder %s22, %s25
    %p34 = scmp.eq.s32.totalorder %s17, 1
    %p35 = por %p33, %p34
    %p36 = scmp.ne.s32.totalorder %s25, %s26
    %p37 = scmp.eq.s32.totalorder %s17, 0
    %p38 = por %p36, %p37
    %p39 = scmp.ne.s32.totalorder %s25, %s26
    %p40 = scmp.eq.s32.totalorder %s18, 1
    %p41 = por %p39, %p40
    %p43 = scmp.ne.s32.totalorder %s26, %s42
    %p44 = scmp.eq.s32.totalorder %s18, 0
    %p45 = por %p43, %p44
    %s46 = ssub.s32 %s12, %s19
    %p47 = scmp.eq.s32.totalorder %s46, 0
    %s49 = sadd.s32 %s48, 1
    %s50 = scalar_select %p47, %s48, %s49
    %p53 = pneg %p47
    %p54 = scmp.eq.s32.totalorder %s12, 1
    %p55 = por %p53, %p54
    %p56 = scmp.ne.s32.totalorder %s48, %s51
    %p57 = scmp.eq.s32.totalorder %s12, 0
    %p58 = por %p56, %p57
    %p59 = scmp.ne.s32.totalorder %s48, %s51
    %p60 = scmp.eq.s32.totalorder %s17, 1
    %p61 = por %p59, %p60
    %p62 = scmp.ne.s32.totalorder %s51, %s52
    %p63 = scmp.eq.s32.totalorder %s17, 0
    %p64 = por %p62, %p63
    %p65 = scmp.ne.s32.totalorder %s51, %s52
    %p66 = scmp.eq.s32.totalorder %s18, 1
    %p67 = por %p65, %p66
    %p69 = scmp.ne.s32.totalorder %s52, %s68
    %p70 = scmp.eq.s32.totalorder %s18, 0
    %p71 = por %p69, %p70
    %s73 = sadd.s32 %s72, 1
    %p76 = scmp.eq.s32.totalorder %s12, 1
    %p77 = scmp.ne.s32.totalorder %s72, %s74
    %p78 = scmp.eq.s32.totalorder %s12, 0
    %p79 = por %p77, %p78
    %p80 = scmp.ne.s32.totalorder %s72, %s74
    %p81 = scmp.eq.s32.totalorder %s17, 1
    %p82 = por %p80, %p81
    %p83 = scmp.ne.s32.totalorder %s74, %s75
    %p84 = scmp.eq.s32.totalorder %s17, 0
    %p85 = por %p83, %p84
    %p86 = scmp.ne.s32.totalorder %s74, %s75
    %p87 = scmp.eq.s32.totalorder %s18, 1
    %p88 = por %p86, %p87
    %p90 = scmp.ne.s32.totalorder %s75, %s89
    %p91 = scmp.eq.s32.totalorder %s18, 0
    %p92 = por %p90, %p91
    %s94 = sadd.s32 %s93, 1
    %p97 = scmp.eq.s32.totalorder %s12, 1
    %p98 = scmp.ne.s32.totalorder %s93, %s95
    %p99 = scmp.eq.s32.totalorder %s12, 0
    %p100 = por %p98, %p99
    %p101 = scmp.ne.s32.totalorder %s93, %s95
    %p102 = scmp.eq.s32.totalorder %s17, 1
    %p103 = por %p101, %p102
    %p104 = scmp.ne.s32.totalorder %s95, %s96
    %p105 = scmp.eq.s32.totalorder %s17, 0
    %p106 = por %p104, %p105
    %p107 = scmp.ne.s32.totalorder %s95, %s96
    %p108 = scmp.eq.s32.totalorder %s18, 1
    %p109 = por %p107, %p108
    %p111 = scmp.ne.s32.totalorder %s96, %s110
    %p112 = scmp.eq.s32.totalorder %s18, 0
    %p113 = por %p111, %p112
    %s115 = sadd.s32 %s114, 1
    %p118 = scmp.eq.s32.totalorder %s12, 1
    %p119 = scmp.ne.s32.totalorder %s114, %s116
    %p120 = scmp.eq.s32.totalorder %s12, 0
    %p121 = por %p119, %p120
    %p122 = scmp.ne.s32.totalorder %s114, %s116
    %p123 = scmp.eq.s32.totalorder %s17, 1
    %p124 = por %p122, %p123
    %p125 = scmp.ne.s32.totalorder %s116, %s117
    %p126 = scmp.eq.s32.totalorder %s17, 0
    %p127 = por %p125, %p126
    %p128 = scmp.ne.s32.totalorder %s116, %s117
    %p129 = scmp.eq.s32.totalorder %s18, 1
    %p130 = por %p128, %p129
    %p132 = scmp.ne.s32.totalorder %s117, %s131
    %p133 = scmp.eq.s32.totalorder %s18, 0
    %p134 = por %p132, %p133
    %s136 = sadd.s32 %s135, 1
    %p139 = scmp.eq.s32.totalorder %s12, 1
    %p140 = scmp.ne.s32.totalorder %s135, %s137
    %p141 = scmp.eq.s32.totalorder %s12, 0
    %p142 = por %p140, %p141
    %p143 = scmp.ne.s32.totalorder %s135, %s137
    %p144 = scmp.eq.s32.totalorder %s17, 1
    %p145 = por %p143, %p144
    %p146 = scmp.ne.s32.totalorder %s137, %s138
    %p147 = scmp.eq.s32.totalorder %s17, 0
    %p148 = por %p146, %p147
    %p149 = scmp.ne.s32.totalorder %s137, %s138
    %p150 = scmp.eq.s32.totalorder %s18, 1
    %p151 = por %p149, %p150
    %p153 = scmp.ne.s32.totalorder %s138, %s152
    %p154 = scmp.eq.s32.totalorder %s18, 0
    %p155 = por %p153, %p154
    %s156 = ssub.s32 %s12, %s19
    %p157 = scmp.eq.s32.totalorder %s156, 0
    %s159 = sadd.s32 %s158, 1
    %s160 = scalar_select %p157, %s158, %s159
    %p163 = pneg %p157
    %p164 = scmp.eq.s32.totalorder %s12, 1
    %p165 = por %p163, %p164
    %p166 = scmp.ne.s32.totalorder %s158, %s161
    %p167 = scmp.eq.s32.totalorder %s12, 0
    %p168 = por %p166, %p167
    %p169 = scmp.ne.s32.totalorder %s158, %s161
    %p170 = scmp.eq.s32.totalorder %s17, 1
    %p171 = por %p169, %p170
    %p172 = scmp.ne.s32.totalorder %s161, %s162
    %p173 = scmp.eq.s32.totalorder %s17, 0
    %p174 = por %p172, %p173
    %p175 = scmp.ne.s32.totalorder %s161, %s162
    %p176 = scmp.eq.s32.totalorder %s18, 1
    %p177 = por %p175, %p176
    %p179 = scmp.ne.s32.totalorder %s162, %s178
    %p180 = scmp.eq.s32.totalorder %s18, 0
    %p181 = por %p179, %p180
    %p182 = scmp.le.s32.totalorder 1, %s12
    %p183 = scmp.lt.s32.totalorder %s12, 3
    %p184 = pnand %p182, %p183
    %p185 = pneg %p184
    // Predicated region
    $region9: #{con_forward.1} parent=5 // pred_check
      _
    $region10: #{con_forward.1} parent=5 // pred_check_branch
      %187 = sbr.rel (%p184) target = $region12
    $region11: #{con_forward.1} parent=5 // pred_region
      %s188 = ssub.s32 %s12, 1
      // Predicated region
      $region13: #{con_forward.1} parent=11 // pred_check
        %p189 = pneg %p85
      $region14: #{con_forward.1} parent=11 // pred_check_branch
        %191 = sbr.rel (%p189) target = $region16
      $region15: #{con_forward.1} parent=11 // pred_region
        _
      $region16: #{con_forward.1} parent=11 // pred_fallthru
        _
      // Predicated region
      $region17: #{con_forward.1} parent=11 // pred_check
        %p192 = pneg %p106
      $region18: #{con_forward.1} parent=11 // pred_check_branch
        %194 = sbr.rel (%p192) target = $region20
      $region19: #{con_forward.1} parent=11 // pred_region
        _
      $region20: #{con_forward.1} parent=11 // pred_fallthru
        _
      // Predicated region
      $region21: #{con_forward.1} parent=11 // pred_check
        %p195 = pneg %p127
      $region22: #{con_forward.1} parent=11 // pred_check_branch
        %197 = sbr.rel (%p195) target = $region24
      $region23: #{con_forward.1} parent=11 // pred_region
        _
      $region24: #{con_forward.1} parent=11 // pred_fallthru
        _
      // Predicated region
      $region25: #{con_forward.1} parent=11 // pred_check
        %p198 = pneg %p148
      $region26: #{con_forward.1} parent=11 // pred_check_branch
        %200 = sbr.rel (%p198) target = $region28
      $region27: #{con_forward.1} parent=11 // pred_region
        _
      $region28: #{con_forward.1} parent=11 // pred_fallthru
        _
    $region12: #{con_forward.1} parent=5 // pred_fallthru
      _
    %p201 = scmp.lt.s32.totalorder %s12, 2
    // Predicated region
    $region29: #{con_forward.1} parent=5 // pred_check
      %p202 = pneg %p201
    $region30: #{con_forward.1} parent=5 // pred_check_branch
      %204 = sbr.rel (%p202) target = $region32
    $region31: #{con_forward.1} parent=5 // pred_region
      // Predicated region
      $region33: #{con_forward.1} parent=31 // pred_check
        %p205 = pneg %p32
      $region34: #{con_forward.1} parent=31 // pred_check_branch
        %207 = sbr.rel (%p205) target = $region36
      $region35: #{con_forward.1} parent=31 // pred_region
        %p208 = scmp.lt.s32.totalorder %s12, 1
        %s209 = scalar_select %p208, %s12, 1
        %s210 = smul.addr %s209, 2
        %s211 = smul.addr %s210, 4
        %s212 = scalar_lea.vmem %s0, %s211
      $region36: #{con_forward.1} parent=31 // pred_fallthru
        _
      // Predicated region
      $region37: #{con_forward.1} parent=31 // pred_check
        %p213 = pneg %p58
      $region38: #{con_forward.1} parent=31 // pred_check_branch
        %215 = sbr.rel (%p213) target = $region40
      $region39: #{con_forward.1} parent=31 // pred_region
        %p216 = scmp.lt.s32.totalorder %s12, 1
        %s217 = scalar_select %p216, %s12, 1
        %s218 = smul.addr %s217, 2
        %s219 = smul.addr %s218, 4
        %s220 = scalar_lea.vmem %s1, %s219
      $region40: #{con_forward.1} parent=31 // pred_fallthru
        _
    $region32: #{con_forward.1} parent=5 // pred_fallthru
      _
    %p221 = scmp.le.s32.totalorder 1, %s12
    %p222 = scmp.lt.s32.totalorder %s12, 3
    %p223 = pnand %p221, %p222
    %p224 = pneg %p223
    // Predicated region
    $region41: #{con_forward.1} parent=5 // pred_check
      _
    $region42: #{con_forward.1} parent=5 // pred_check_branch
      %226 = sbr.rel (%p223) target = $region44
    $region43: #{con_forward.1} parent=5 // pred_region
      %s227 = ssub.s32 %s12, 1
      %p228 = scmp.lt.s32.totalorder %s17, 1
      %s229 = scalar_select %p228, %s17, 1
      %s230 = smul.addr %s229, 2
      %s231 = smul.addr %s230, 4
      %s232 = scalar_lea.vmem %s0, %s231
      %p233 = pneg %p38
      %p234 = pneg %p35
      %p235 = scmp.lt.s32.totalorder %s17, 1
      %s236 = scalar_select %p235, %s17, 1
      %s237 = smul.addr %s236, 2
      %s238 = smul.addr %s237, 4
      %s239 = scalar_lea.vmem %s1, %s238
      %p240 = pneg %p64
      %p241 = pneg %p61
      %p242 = pneg %p85
      %p243 = pneg %p82
      %p244 = pneg %p106
      %p245 = pneg %p103
      %p246 = pneg %p127
      %p247 = pneg %p124
      %p248 = pneg %p148
      %p249 = pneg %p145
      %p250 = pneg %p174
      %p251 = pneg %p171
      %p252 = scmp.lt.s32.totalorder %s17, 1
      %s253 = scalar_select %p252, %s17, 1
      %s254 = smul.addr %s253, 2
      %s255 = smul.addr %s254, 8
      %s256 = scalar_lea.vmem %s6, %s255
      %p257 = scmp.lt.s32.totalorder %s17, 1
      %s258 = scalar_select %p257, %s17, 1
      %s259 = smul.addr %s258, 2
      %s260 = smul.addr %s259, 4
      %s261 = scalar_lea.vmem %s0, %s260
      %p262 = scmp.lt.s32.totalorder %s17, 1
      %s263 = scalar_select %p262, %s17, 1
      %s264 = smul.addr %s263, 2
      %s265 = smul.addr %s264, 4
      %s266 = scalar_lea.vmem %s1, %s265
      %p267 = scmp.lt.s32.totalorder %s17, 1
      %s268 = scalar_select %p267, %s17, 1
      %s269 = smul.addr %s268, 2
      %s270 = smul.addr %s269, 8
      %s271 = scalar_lea.vmem %s6, %s270
      %v272 = vlaneseq
      %v273 = vand.u32 %v272, 127
      %v274 = vadd.s32 %v273, 128
      %vm275 = vcmp.lt.s32.totalorder %v273, 0
      %v276 = vsub.s32 0, %v273
      %v277 = vsel %vm275, %v276, %v273
      %v278 = vshrl.u32 %v277, 4
      %v279 = vand.u32 %v277, 15
      %v280 = vsub.s32 0, %v279
      %v281 = vsel %vm275, %v280, %v279
      %vm282 = vcmp.lt.s32.totalorder %v274, 0
      %v283 = vsub.s32 0, %v274
      %v284 = vsel %vm282, %v283, %v274
      %v285 = vshrl.u32 %v284, 4
      %v286 = vand.u32 %v284, 15
      %v287 = vsub.s32 0, %v286
      %v288 = vsel %vm282, %v287, %v286
      %vm289 = vcmp.ne.s32.totalorder %v281, 0
      %vm290 = vcmp.ne.s32.totalorder %v288, 0
      %vm291 = vcmp.lt.s32.totalorder %v281, 0
      %vm292 = vcmp.lt.s32.totalorder %v288, 0
      %vm293 = vmand %vm291, %vm289
      %vm294 = vmand %vm292, %vm290
      %v295 = vadd.s32 %v281, 16
      %v296 = vadd.s32 %v288, 16
      %v297 = vsel %vm293, %v295, %v281
      %v298 = vsel %vm294, %v296, %v288
      %vm299 = vcmp.eq.s32.totalorder %v297, 0
      %vm300 = vcmp.eq.s32.totalorder %v298, 0
      %v301 = vsel %vm299, 0.0, 1.0
      %v302 = vsel %vm300, 0.0, 1.0
      %vm303 = vcmp.eq.s32.totalorder %v297, 15
      %vm304 = vcmp.eq.s32.totalorder %v298, 15
      %v305 = vsel %vm303, 0.0, 1.0
      %v306 = vsel %vm304, 0.0, 1.0
      %v307 = vld [vmem:[%s261] sm:$0xff]
      %v308 = vld [vmem:[%s266] sm:$0xff]
      %v310 = vcombine.high %v307, %v307
      %v313 = vcombine.low %v308, %v308
      %vm315 = vcmask 1043456
      %v316 = vsel %vm315, %v307, %v313
      %v317 = vsel %vm315, %v310, %v308
      %320 = vrot.lane.b32.xlu0 %v316, 17
      %v321 = vpop.permute.xlu0 %320
      %322 = vrot.lane.b32.xlu0 %v317, 17
      %v323 = vpop.permute.xlu0 %322
      %vm324 = vcmask 138240
      %v325 = vsel %vm324, %v321, %v323
      %v329 = vsel %vm324, 0.0, %v321
      %v330 = vsel %vm324, %v323, 0.0
      %v331 = vmul.f32 %v329, %v301
      %v332 = vmul.f32 %v325, %v302
      %335 = vrot.lane.b32.xlu0 %v305, 2
      %v336 = vpop.permute.xlu0 %335
      %337 = vrot.lane.b32.xlu0 %v306, 2
      %v338 = vpop.permute.xlu0 %337
      %vm339 = vcmask 15360
      %v340 = vsel %vm339, %v336, %v338
      %v344 = vmul.f32 %v329, %v336
      %v345 = vmul.f32 %v325, %v340
      %v346 = vmul.f32 %v330, %v338
      %349 = vrot.lane.b32.xlu0 %v301, 16
      %v350 = vpop.permute.xlu0 %349
      %351 = vrot.lane.b32.xlu0 %v302, 16
      %v352 = vpop.permute.xlu0 %351
      %vm353 = vcmask 130048
      %v354 = vsel %vm353, %v350, %v352
      %v358 = vmul.f32 %v329, %v350
      %v359 = vmul.f32 %v325, %v354
      %v360 = vmul.f32 %v330, %v352
      %361 = vrot.lane.b32.xlu0 %v305, 18
      %v362 = vpop.permute.xlu0 %361
      %363 = vrot.lane.b32.xlu0 %v306, 18
      %v364 = vpop.permute.xlu0 %363
      %vm365 = vcmask 146432
      %v366 = vsel %vm365, %v362, %v364
      %v370 = vmul.f32 %v329, %v362
      %v371 = vmul.f32 %v325, %v366
      %v372 = vmul.f32 %v330, %v364
      %373 = vrot.lane.b32.xlu0 %v301, 32
      %v374 = vpop.permute.xlu0 %373
      %375 = vrot.lane.b32.xlu0 %v302, 32
      %v376 = vpop.permute.xlu0 %375
      %vm377 = vcmask 261120
      %v378 = vsel %vm377, %v374, %v376
      %v382 = vmul.f32 %v329, %v374
      %v383 = vmul.f32 %v325, %v378
      %v384 = vmul.f32 %v330, %v376
      %385 = vrot.lane.b32.xlu0 %v305, 34
      %v386 = vpop.permute.xlu0 %385
      %387 = vrot.lane.b32.xlu0 %v306, 34
      %v388 = vpop.permute.xlu0 %387
      %vm389 = vcmask 277504
      %v390 = vsel %vm389, %v386, %v388
      %v394 = vmul.f32 %v329, %v386
      %v395 = vmul.f32 %v325, %v390
      %v396 = vmul.f32 %v330, %v388
      %399 = vrot.lane.b32.xlu0 %v329, 127
      %v400 = vpop.permute.xlu0 %399
      %401 = vrot.lane.b32.xlu0 %v325, 127
      %v402 = vpop.permute.xlu0 %401
      %403 = vrot.lane.b32.xlu0 %v330, 127
      %v404 = vpop.permute.xlu0 %403
      %vm405 = vcmask 1039360
      %v406 = vsel %vm405, %v400, %v402
      %v407 = vsel %vm405, %v402, %v404
      %413 = vrot.lane.b32.xlu0 %v344, 126
      %v414 = vpop.permute.xlu0 %413
      %415 = vrot.lane.b32.xlu0 %v345, 126
      %v416 = vpop.permute.xlu0 %415
      %417 = vrot.lane.b32.xlu0 %v346, 126
      %v418 = vpop.permute.xlu0 %417
      %vm419 = vcmask 1031168
      %v420 = vsel %vm419, %v414, %v416
      %v421 = vsel %vm419, %v416, %v418
      %427 = vrot.lane.b32.xlu0 %v358, 112
      %v428 = vpop.permute.xlu0 %427
      %429 = vrot.lane.b32.xlu0 %v359, 112
      %v430 = vpop.permute.xlu0 %429
      %431 = vrot.lane.b32.xlu0 %v360, 112
      %v432 = vpop.permute.xlu0 %431
      %vm433 = vcmask 916480
      %v434 = vsel %vm433, %v428, %v430
      %v435 = vsel %vm433, %v430, %v432
      %438 = vrot.lane.b32.xlu0 %v329, 111
      %v439 = vpop.permute.xlu0 %438
      %440 = vrot.lane.b32.xlu0 %v325, 111
      %v441 = vpop.permute.xlu0 %440
      %442 = vrot.lane.b32.xlu0 %v330, 111
      %v443 = vpop.permute.xlu0 %442
      %vm444 = vcmask 908288
      %v445 = vsel %vm444, %v439, %v441
      %v446 = vsel %vm444, %v441, %v443
      %452 = vrot.lane.b32.xlu0 %v370, 110
      %v453 = vpop.permute.xlu0 %452
      %454 = vrot.lane.b32.xlu0 %v371, 110
      %v455 = vpop.permute.xlu0 %454
      %456 = vrot.lane.b32.xlu0 %v372, 110
      %v457 = vpop.permute.xlu0 %456
      %vm458 = vcmask 900096
      %v459 = vsel %vm458, %v453, %v455
      %v460 = vsel %vm458, %v455, %v457
      %466 = vrot.lane.b32.xlu0 %v382, 96
      %v467 = vpop.permute.xlu0 %466
      %468 = vrot.lane.b32.xlu0 %v383, 96
      %v469 = vpop.permute.xlu0 %468
      %470 = vrot.lane.b32.xlu0 %v384, 96
      %v471 = vpop.permute.xlu0 %470
      %vm472 = vcmask 785408
      %v473 = vsel %vm472, %v467, %v469
      %v474 = vsel %vm472, %v469, %v471
      %477 = vrot.lane.b32.xlu0 %v329, 95
      %v478 = vpop.permute.xlu0 %477
      %479 = vrot.lane.b32.xlu0 %v325, 95
      %v480 = vpop.permute.xlu0 %479
      %481 = vrot.lane.b32.xlu0 %v330, 95
      %v482 = vpop.permute.xlu0 %481
      %vm483 = vcmask 777216
      %v484 = vsel %vm483, %v478, %v480
      %v485 = vsel %vm483, %v480, %v482
      %491 = vrot.lane.b32.xlu0 %v394, 94
      %v492 = vpop.permute.xlu0 %491
      %493 = vrot.lane.b32.xlu0 %v395, 94
      %v494 = vpop.permute.xlu0 %493
      %495 = vrot.lane.b32.xlu0 %v396, 94
      %v496 = vpop.permute.xlu0 %495
      %vm497 = vcmask 769024
      %v498 = vsel %vm497, %v492, %v494
      %v499 = vsel %vm497, %v494, %v496
      %v502 = vld [vmem:[%s2] sm:$0xff]
      %v503 = vld [vmem:[%s3] sm:$0xff]
      %505 = vset.pattern.permute.xlu0 0
      %506 = vperm.xlu0 %505, %v503
      %v507 = vpop.permute.xlu0 %506
      %vm509 = vcmask 588800
      %v511 = vsel %vm509, %v502, 0
      %513 = vmatprep.subr.mxu0 %v332
      %514 = vmatpush1.msra.mxu0 %v331
      %515 = vmatprep.subr.mxu0 %v407
      %516 = vmatpush1.msra.mxu0 %v406
      %517 = vmatprep.subr.mxu0 %v421
      %518 = vmatpush1.msra.mxu0 %v420
      %519 = vmatprep.subr.mxu0 %v435
      %520 = vmatpush1.msra.mxu0 %v434
      %521 = vmatprep.subr.mxu0 %v446
      %522 = vmatpush1.msra.mxu0 %v445
      %523 = vmatprep.subr.mxu0 %v460
      %524 = vmatpush1.msra.mxu0 %v459
      %525 = vmatprep.subr.mxu0 %v474
      %526 = vmatpush1.msra.mxu0 %v473
      %527 = vmatprep.subr.mxu0 %v485
      %528 = vmatpush1.msra.mxu0 %v484
      %529 = vmatprep.subr.mxu0 %v499
      %530 = vmatpush1.msra.mxu0 %v498
      %531 = vmatprep.subr.mxu0 0.0
      %532 = vmatpush1.msra.mxu0 0.0
      %533 = vmatprep.subr.mxu0 0.0
      %534 = vmatpush1.msra.mxu0 0.0
      %535 = vmatprep.subr.mxu0 0.0
      %536 = vmatpush1.msra.mxu0 0.0
      %537 = vmatprep.subr.mxu0 0.0
      %538 = vmatpush1.msra.mxu0 0.0
      %539 = vmatprep.subr.mxu0 0.0
      %540 = vmatpush1.msra.mxu0 0.0
      %541 = vmatprep.subr.mxu0 0.0
      %542 = vmatpush1.msra.mxu0 0.0
      %543 = vmatprep.subr.mxu0 0.0
      %544 = vmatpush1.msra.mxu0 0.0
      %545 = vmatprep.subr.mxu0 0.0
      %546 = vmatpush1.msra.mxu0 0.0
      %547 = vmatprep.subr.mxu0 0.0
      %548 = vmatpush1.msra.mxu0 0.0
      %549 = vmatprep.subr.mxu0 0.0
      %550 = vmatpush1.msra.mxu0 0.0
      %551 = vmatprep.subr.mxu0 0.0
      %552 = vmatpush1.msra.mxu0 0.0
      %553 = vmatprep.subr.mxu0 0.0
      %554 = vmatpush1.msra.mxu0 0.0
      %555 = vmatprep.subr.mxu0 0.0
      %556 = vmatpush1.msra.mxu0 0.0
      %557 = vmatprep.subr.mxu0 0.0
      %558 = vmatpush1.msra.mxu0 0.0
      %559 = vmatprep.subr.mxu0 0.0
      %560 = vmatpush1.msra.mxu0 0.0
      %561 = vmatprep.subr.mxu0 0.0
      %562 = vmatpush1.msra.mxu0 0.0
      %563 = vmatprep.subr.mxu0 0.0
      %564 = vmatpush1.msra.mxu0 0.0
      %565 = vmatprep.subr.mxu0 0.0
      %566 = vmatpush1.msra.mxu0 0.0
      %567 = vmatprep.subr.mxu0 0.0
      %568 = vmatpush1.msra.mxu0 0.0
      %569 = vmatprep.subr.mxu0 0.0
      %570 = vmatpush1.msra.mxu0 0.0
      %571 = vmatprep.subr.mxu0 0.0
      %572 = vmatpush1.msra.mxu0 0.0
      %573 = vmatprep.subr.mxu0 0.0
      %574 = vmatpush1.msra.mxu0 0.0
      %575 = vmatprep.subr.mxu0 0.0
      %576 = vmatpush1.msra.mxu0 0.0
      %577 = vmatprep.mubr.f32.mxu0 0.0
      %578 = vmatmul.mubr.f32.gmra.mrb[0].mxu0 %v511
      %v579 = vpop.f32.mrb[0].mxu0
      %v580 = vadd.f32 %v507, %v579
      %v581 = vpop.f32.mrb[0].mxu0
      %v582 = vadd.f32 %v507, %v581
      %583 = vdwg.mxu0
      %v584 = vmax.f32 %v580, 0.0
      %v585 = vmax.f32 %v582, 0.0
      %588 = vrot.lane.b32.xlu0 %v584, 17
      %v589 = vpop.permute.xlu0 %588
      %590 = vrot.lane.b32.xlu0 %v585, 17
      %v591 = vpop.permute.xlu0 %590
      %v592 = vsel %vm324, %v589, %v591
      %v596 = vsel %vm324, 0.0, %v589
      %v597 = vsel %vm324, %v591, 0.0
      %v598 = vmul.f32 %v596, %v301
      %v599 = vmul.f32 %v592, %v302
      %v600 = vmul.f32 %v596, %v336
      %v601 = vmul.f32 %v592, %v340
      %v602 = vmul.f32 %v597, %v338
      %v603 = vmul.f32 %v596, %v350
      %v604 = vmul.f32 %v592, %v354
      %v605 = vmul.f32 %v597, %v352
      %v606 = vmul.f32 %v596, %v362
      %v607 = vmul.f32 %v592, %v366
      %v608 = vmul.f32 %v597, %v364
      %v609 = vmul.f32 %v596, %v374
      %v610 = vmul.f32 %v592, %v378
      %v611 = vmul.f32 %v597, %v376
      %v612 = vmul.f32 %v596, %v386
      %v613 = vmul.f32 %v592, %v390
      %v614 = vmul.f32 %v597, %v388
      %617 = vrot.lane.b32.xlu0 %v596, 127
      %v618 = vpop.permute.xlu0 %617
      %619 = vrot.lane.b32.xlu0 %v592, 127
      %v620 = vpop.permute.xlu0 %619
      %621 = vrot.lane.b32.xlu0 %v597, 127
      %v622 = vpop.permute.xlu0 %621
      %v623 = vsel %vm405, %v618, %v620
      %v624 = vsel %vm405, %v620, %v622
      %630 = vrot.lane.b32.xlu0 %v600, 126
      %v631 = vpop.permute.xlu0 %630
      %632 = vrot.lane.b32.xlu0 %v601, 126
      %v633 = vpop.permute.xlu0 %632
      %634 = vrot.lane.b32.xlu0 %v602, 126
      %v635 = vpop.permute.xlu0 %634
      %v636 = vsel %vm419, %v631, %v633
      %v637 = vsel %vm419, %v633, %v635
      %643 = vrot.lane.b32.xlu0 %v603, 112
      %v644 = vpop.permute.xlu0 %643
      %645 = vrot.lane.b32.xlu0 %v604, 112
      %v646 = vpop.permute.xlu0 %645
      %647 = vrot.lane.b32.xlu0 %v605, 112
      %v648 = vpop.permute.xlu0 %647
      %v649 = vsel %vm433, %v644, %v646
      %v650 = vsel %vm433, %v646, %v648
      %653 = vrot.lane.b32.xlu0 %v596, 111
      %v654 = vpop.permute.xlu0 %653
      %655 = vrot.lane.b32.xlu0 %v592, 111
      %v656 = vpop.permute.xlu0 %655
      %657 = vrot.lane.b32.xlu0 %v597, 111
      %v658 = vpop.permute.xlu0 %657
      %v659 = vsel %vm444, %v654, %v656
      %v660 = vsel %vm444, %v656, %v658
      %666 = vrot.lane.b32.xlu0 %v606, 110
      %v667 = vpop.permute.xlu0 %666
      %668 = vrot.lane.b32.xlu0 %v607, 110
      %v669 = vpop.permute.xlu0 %668
      %670 = vrot.lane.b32.xlu0 %v608, 110
      %v671 = vpop.permute.xlu0 %670
      %v672 = vsel %vm458, %v667, %v669
      %v673 = vsel %vm458, %v669, %v671
      %679 = vrot.lane.b32.xlu0 %v609, 96
      %v680 = vpop.permute.xlu0 %679
      %681 = vrot.lane.b32.xlu0 %v610, 96
      %v682 = vpop.permute.xlu0 %681
      %683 = vrot.lane.b32.xlu0 %v611, 96
      %v684 = vpop.permute.xlu0 %683
      %v685 = vsel %vm472, %v680, %v682
      %v686 = vsel %vm472, %v682, %v684
      %689 = vrot.lane.b32.xlu0 %v596, 95
      %v690 = vpop.permute.xlu0 %689
      %691 = vrot.lane.b32.xlu0 %v592, 95
      %v692 = vpop.permute.xlu0 %691
      %693 = vrot.lane.b32.xlu0 %v597, 95
      %v694 = vpop.permute.xlu0 %693
      %v695 = vsel %vm483, %v690, %v692
      %v696 = vsel %vm483, %v692, %v694
      %702 = vrot.lane.b32.xlu0 %v612, 94
      %v703 = vpop.permute.xlu0 %702
      %704 = vrot.lane.b32.xlu0 %v613, 94
      %v705 = vpop.permute.xlu0 %704
      %706 = vrot.lane.b32.xlu0 %v614, 94
      %v707 = vpop.permute.xlu0 %706
      %v708 = vsel %vm497, %v703, %v705
      %v709 = vsel %vm497, %v705, %v707
      %v712 = vld [vmem:[%s4] sm:$0xff]
      %v713 = vld [vmem:[%s5] sm:$0xff]
      %715 = vset.pattern.permute.xlu0 0
      %716 = vperm.xlu0 %715, %v713
      %v717 = vpop.permute.xlu0 %716
      %v720 = vsel %vm509, %v712, 0
      %722 = vmatprep.subr.mxu0 %v599
      %723 = vmatpush1.msra.mxu0 %v598
      %724 = vmatprep.subr.mxu0 %v624
      %725 = vmatpush1.msra.mxu0 %v623
      %726 = vmatprep.subr.mxu0 %v637
      %727 = vmatpush1.msra.mxu0 %v636
      %728 = vmatprep.subr.mxu0 %v650
      %729 = vmatpush1.msra.mxu0 %v649
      %730 = vmatprep.subr.mxu0 %v660
      %731 = vmatpush1.msra.mxu0 %v659
      %732 = vmatprep.subr.mxu0 %v673
      %733 = vmatpush1.msra.mxu0 %v672
      %734 = vmatprep.subr.mxu0 %v686
      %735 = vmatpush1.msra.mxu0 %v685
      %736 = vmatprep.subr.mxu0 %v696
      %737 = vmatpush1.msra.mxu0 %v695
      %738 = vmatprep.subr.mxu0 %v709
      %739 = vmatpush1.msra.mxu0 %v708
      %740 = vmatprep.subr.mxu0 0.0
      %741 = vmatpush1.msra.mxu0 0.0
      %742 = vmatprep.subr.mxu0 0.0
      %743 = vmatpush1.msra.mxu0 0.0
      %744 = vmatprep.subr.mxu0 0.0
      %745 = vmatpush1.msra.mxu0 0.0
      %746 = vmatprep.subr.mxu0 0.0
      %747 = vmatpush1.msra.mxu0 0.0
      %748 = vmatprep.subr.mxu0 0.0
      %749 = vmatpush1.msra.mxu0 0.0
      %750 = vmatprep.subr.mxu0 0.0
      %751 = vmatpush1.msra.mxu0 0.0
      %752 = vmatprep.subr.mxu0 0.0
      %753 = vmatpush1.msra.mxu0 0.0
      %754 = vmatprep.subr.mxu0 0.0
      %755 = vmatpush1.msra.mxu0 0.0
      %756 = vmatprep.subr.mxu0 0.0
      %757 = vmatpush1.msra.mxu0 0.0
      %758 = vmatprep.subr.mxu0 0.0
      %759 = vmatpush1.msra.mxu0 0.0
      %760 = vmatprep.subr.mxu0 0.0
      %761 = vmatpush1.msra.mxu0 0.0
      %762 = vmatprep.subr.mxu0 0.0
      %763 = vmatpush1.msra.mxu0 0.0
      %764 = vmatprep.subr.mxu0 0.0
      %765 = vmatpush1.msra.mxu0 0.0
      %766 = vmatprep.subr.mxu0 0.0
      %767 = vmatpush1.msra.mxu0 0.0
      %768 = vmatprep.subr.mxu0 0.0
      %769 = vmatpush1.msra.mxu0 0.0
      %770 = vmatprep.subr.mxu0 0.0
      %771 = vmatpush1.msra.mxu0 0.0
      %772 = vmatprep.subr.mxu0 0.0
      %773 = vmatpush1.msra.mxu0 0.0
      %774 = vmatprep.subr.mxu0 0.0
      %775 = vmatpush1.msra.mxu0 0.0
      %776 = vmatprep.subr.mxu0 0.0
      %777 = vmatpush1.msra.mxu0 0.0
      %778 = vmatprep.subr.mxu0 0.0
      %779 = vmatpush1.msra.mxu0 0.0
      %780 = vmatprep.subr.mxu0 0.0
      %781 = vmatpush1.msra.mxu0 0.0
      %782 = vmatprep.subr.mxu0 0.0
      %783 = vmatpush1.msra.mxu0 0.0
      %784 = vmatprep.subr.mxu0 0.0
      %785 = vmatpush1.msra.mxu0 0.0
      %786 = vmatprep.mubr.f32.mxu0 0.0
      %787 = vmatmul.mubr.f32.gmra.mrb[0].mxu0 %v720
      %v788 = vpop.f32.mrb[0].mxu0
      %v789 = vadd.f32 %v717, %v788
      %v790 = vpop.f32.mrb[0].mxu0
      %v791 = vadd.f32 %v717, %v790
      %792 = vdwg.mxu0
      %v793 = vmax.f32 %v789, 0.0
      %v794 = vmax.f32 %v791, 0.0
      %795 = vst [vmem:[%s271] sm:$0xff] %v793
      %796 = vst [vmem:[%s271 + $0x8] sm:$0xff] %v794
      %p797 = scmp.lt.s32.totalorder %s17, 1
      %s798 = scalar_select %p797, %s17, 1
      %s799 = smul.addr %s798, 2
      %s800 = smul.addr %s799, 8
      %s801 = scalar_lea.vmem %s6, %s800
      // Predicated region
      $region45: #{con_forward.1} parent=43 // pred_check
        %p802 = pneg %p171
      $region46: #{con_forward.1} parent=43 // pred_check_branch
        %804 = sbr.rel (%p802) target = $region48
      $region47: #{con_forward.1} parent=43 // pred_region
        _
      $region48: #{con_forward.1} parent=43 // pred_fallthru
        _
    $region44: #{con_forward.1} parent=5 // pred_fallthru
      _
    %p805 = scmp.le.s32.totalorder 2, %s12
    // Predicated region
    $region49: #{con_forward.1} parent=5 // pred_check
      %p806 = pneg %p805
    $region50: #{con_forward.1} parent=5 // pred_check_branch
      %808 = sbr.rel (%p806) target = $region52
    $region51: #{con_forward.1} parent=5 // pred_region
      %s809 = ssub.s32 %s12, 2
      // Predicated region
      $region53: #{con_forward.1} parent=51 // pred_check
        %p810 = pneg %p177
      $region54: #{con_forward.1} parent=51 // pred_check_branch
        %812 = sbr.rel (%p810) target = $region56
      $region55: #{con_forward.1} parent=51 // pred_region
        %p813 = scmp.lt.s32.totalorder %s18, 1
        %s814 = scalar_select %p813, %s18, 1
        %s815 = smul.addr %s814, 2
        %s816 = smul.addr %s815, 8
        %s817 = scalar_lea.vmem %s6, %s816
      $region56: #{con_forward.1} parent=51 // pred_fallthru
        _
    $region52: #{con_forward.1} parent=5 // pred_fallthru
      _
  $region6: #{con_forward.1} parent=0 // loop_footer
    %s16 = sadd.s32 1, %s12
  $region7: #{con_forward.1} parent=0 // loop_footer_branch
    %11 = sbr.rel target = $region3
  $region8: #{con_forward.1} parent=0 // loop_exit
    _

</llo_original>
